<compile_context>
chip_gen: v7x
topology: tpu7x:2x2x1
jax: 0.10.0
libtpu: 0.0.40
codegen_flags: <defaults>
</compile_context>

<pallas_src>
import jax
import jax.numpy as jnp
from jax import lax
from jax.experimental import pallas as pl
from jax.experimental.pallas import tpu as pltpu

_MIB = 1024 * 1024


def _cdiv(a, b):
    return -(-a // b)


def _round_up(a, b):
    return _cdiv(a, b) * b


# ---------------------------------------------------------------------------
# Kernel factory: specialized on static configuration flags.
# ---------------------------------------------------------------------------
def _make_rmsnorm_kernel(eps, inv_hidden, quantize, has_residual, write_newres):
    def kernel(*refs):
        if has_residual:
            x_ref, res_ref, w_ref = refs[0], refs[1], refs[2]
            out_refs = refs[3:]
        else:
            x_ref, w_ref = refs[0], refs[1]
            res_ref = None
            out_refs = refs[2:]
        y_ref = out_refs[0]

        # Residual add (only when a residual stream actually exists).
        z = x_ref[...].astype(jnp.float32)
        if has_residual:
            z = z + res_ref[...].astype(jnp.float32)

        # New residual is only DMA'd back to HBM when the caller consumes it.
        if write_newres:
            out_refs[1][...] = z.astype(out_refs[1].dtype)

        # RMS statistics along the hidden (last / lane) axis.  sum * 1/N (not
        # mean over the block width) so a zero-padded lane axis stays exact.
        var = jnp.sum(z * z, axis=-1, keepdims=True) * inv_hidden
        rstd = lax.rsqrt(var + eps)

        # weight is f32 and, on the quantized path, already carries the
        # 1/output_scale factor (folded in the wrapper).
        y = z * rstd * w_ref[...]

        if quantize:
            # NOTE: jnp.round is round-half-to-even; a CUDA round-half-away
            # reference can differ by 1 LSB on exact .5 ties (tests allow +-1).
            y_ref[...] = jnp.clip(jnp.round(y), -128.0, 127.0).astype(y_ref.dtype)
        else:
            y_ref[...] = y.astype(y_ref.dtype)

    return kernel


# ---------------------------------------------------------------------------
# Device / tiling planner (memory-bound elementwise op).
# ---------------------------------------------------------------------------
def _device_info():
    """Returns (per-TensorCore VMEM bytes, TensorCores sharing the grid)."""
    vmem_cap = 64 * _MIB          # conservative default = v7x per-TC VMEM
    num_cores = 0
    try:
        info = pltpu.get_tpu_info()
        vmem_cap = int(getattr(info, "vmem_capacity_bytes", vmem_cap))
        for attr in ("num_tensorcores", "tensorcore_count", "num_cores", "core_count"):
            v = getattr(info, attr, None)
            if isinstance(v, int) and v > 0:
                num_cores = v
                break
    except Exception:
        pass
    # Sanity clamp: anything above 128 MiB is assumed to be a per-chip figure;
    # never size the pipeline past physical per-TC VMEM.
    vmem_cap = max(32 * _MIB, min(vmem_cap, 128 * _MIB))
    if num_cores <= 0:
        # 64 MiB/TC is the v7x signature (2 TCs/chip megacore); v5e/v6e = 1 TC.
        num_cores = 2 if vmem_cap <= 64 * _MIB else 1
    return vmem_cap, num_cores


def _plan_tiling(rows, hidden, in_bpe, out_bpe, out_packs, block_rows_override=None):
    """Pick (block_rows, grid_steps, input buffer depth, vmem_limit_bytes)."""
    vmem_cap, num_cores = _device_info()
    stream_bpe = in_bpe + out_bpe

    # Output-store density: keep the row block a multiple of the widest output
    # sublane pack (8 rows f32 / 16 bf16 / 32 int8) so stores stay unmasked.
    pack = max(out_packs) if out_packs else 8

    if vmem_cap <= 64 * _MIB:
        # v7x-class: ~3.2 TB/s HBM -> short steps; amortize the ~0.35us/step
        # overhead with bigger blocks (larger share of the 64 MiB VMEM).
        pipeline_budget = vmem_cap // 3
        max_rows = 1024
    else:
        # v5e/v6e: roofline already saturates by ~512 rows; reclaim the VMEM.
        pipeline_budget = vmem_cap // 4
        max_rows = 512

    in_buffers = 2

    if block_rows_override is not None:
        block_rows = int(block_rows_override)
    else:
        # Per-row VMEM of one in-flight block: double-buffered HBM streams plus
        # ~2 f32 temporaries (z lives full-tile; y fuses into the store cast).
        bytes_per_row = hidden * (2 * stream_bpe + 2 * 4)
        raw = pipeline_budget // max(bytes_per_row, 1)
        raw = max(pack, min(max_rows, raw))
        block_rows = max(pack, (raw // pack) * pack)

        total_bytes = rows * hidden * stream_bpe
        min_step_bytes = 2 * _MIB   # per-step HBM traffic >> 0.35us step overhead

        if block_rows >= rows:
            # Whole slab fits one block.  Split only when each resulting step
            # still moves enough bytes to dwarf the fixed per-step cost:
            #   2 TCs: >= 4 even steps -> balanced, double-buffered per-core
            #          sub-grids;  1 TC: split only for big slabs so intra-core
            #          DMA/compute overlap actually pays.
            desired = 1
            if num_cores > 1:
                if total_bytes >= 4 * num_cores * min_step_bytes:
                    desired = 4 * num_cores
                elif total_bytes >= 2 * num_cores * min_step_bytes:
                    desired = 2 * num_cores
            elif total_bytes >= 4 * min_step_bytes:
                desired = 4
            if desired > 1:
                block_rows = min(rows, _round_up(_cdiv(rows, desired), pack))
            else:
                block_rows = rows          # single full-slab block (tiny input)
        else:
            n = _cdiv(rows, block_rows)
            if num_cores > 1 and n % 2 == 1:
                # Even step count -> balanced megacore sharding (neither core
                # owns the extra ragged tile alone).
                cand = max(pack, _round_up(_cdiv(rows, n + 1), pack))
                if cand < block_rows:
                    block_rows = cand
            # Very small blocks (huge hidden): per-step compute is short and
            # DMA issue latency is exposed at depth 2 -> buffer deeper.
            if block_rows <= 64 and _cdiv(rows, block_rows) >= 4:
                in_buffers = 3

    n_steps = _cdiv(rows, block_rows)

    # vmem_limit sized to the actual working set (+25% and slack), not a fixed
    # fraction of capacity, so neighbouring XLA fusions keep their scoped VMEM.
    block_elems = block_rows * hidden
    working = (block_elems * (in_buffers * in_bpe + 2 * out_bpe)
               + block_elems * 2 * 4            # f32 temporaries
               + 2 * hidden * 4)                # (1, hidden) f32 weight buffers
    vmem_limit = int(working * 1.25) + 4 * _MIB
    vmem_limit = max(16 * _MIB, min(vmem_limit, vmem_cap - 8 * _MIB))
    return block_rows, n_steps, in_buffers, vmem_limit


def _row_spec(block_rows, hidden, buffers=2):
    if buffers > 2:
        try:
            return pl.BlockSpec((block_rows, hidden), lambda i: (i, 0),
                                pipeline_mode=pl.Buffered(buffers))
        except Exception:   # pipeline_mode / Buffered unavailable -> default depth
            pass
    return pl.BlockSpec((block_rows, hidden), lambda i: (i, 0))


# ---------------------------------------------------------------------------
# Wrapper matching FusedRMSNorm.forward.
# ---------------------------------------------------------------------------
def fused_rms_norm(x, weight, *, eps=1e-5, output_scale=0.0,
                   residual=None, prenorm=False, inplace_residual=False,
                   _block_rows_override=None):
    orig_shape = x.shape
    hidden = orig_shape[-1]
    assert weight.shape[-1] == hidden

    x2 = x.reshape(-1, hidden)
    rows = x2.shape[0]

    has_residual = residual is not None
    quantize = (float(output_scale) != 0.0)
    write_newres = has_residual and prenorm
    y_dtype = jnp.int8 if quantize else x.dtype
    # New residual keeps the residual's dtype (matches the fused-CUDA in-place
    # update contract and keeps the input/output alias legal).
    res_dtype = residual.dtype if has_residual else x.dtype

    if has_residual:
        assert residual.shape == orig_shape
        res2 = residual.reshape(-1, hidden)
    else:
        res2 = None

    # Fold 1/output_scale into the (tiny) weight vector; always pass f32.
    w2 = weight.astype(jnp.float32).reshape(1, hidden)
    if quantize:
        w2 = w2 * (1.0 / float(output_scale))

    # Lane padding: non-128-aligned hidden forces masked output stores.  Pad in
    # the wrapper only when the extra traffic is small (<= hidden/8); the
    # in-kernel statistics divide by the true hidden so padding is exact.
    hidden_k = hidden
    pad = 0
    if hidden % 128 != 0:
        padded = _round_up(hidden, 128)
        if padded - hidden <= hidden // 8:
            pad = padded - hidden
            hidden_k = padded
            x2 = jnp.pad(x2, ((0, 0), (0, pad)))
            if has_residual:
                res2 = jnp.pad(res2, ((0, 0), (0, pad)))
            w2 = jnp.pad(w2, ((0, 0), (0, pad)))

    # HBM streams actually present for this variant.
    in_bpe = jnp.dtype(x.dtype).itemsize
    if has_residual:
        in_bpe += jnp.dtype(res2.dtype).itemsize
    out_bpe = jnp.dtype(y_dtype).itemsize
    out_packs = [32 // jnp.dtype(y_dtype).itemsize]
    if write_newres:
        out_bpe += jnp.dtype(res_dtype).itemsize
        out_packs.append(32 // jnp.dtype(res_dtype).itemsize)

    block_rows, n_steps, in_buffers, vmem_limit = _plan_tiling(
        rows, hidden_k, in_bpe, out_bpe, out_packs, _block_rows_override)

    grid = (n_steps,)
    row_in_spec = _row_spec(block_rows, hidden_k, in_buffers)
    row_out_spec = _row_spec(block_rows, hidden_k, 2)
    w_spec = pl.BlockSpec((1, hidden_k), lambda i: (0, 0))

    in_specs = [row_in_spec]
    inputs = [x2]
    if has_residual:
        in_specs.append(row_in_spec)
        inputs.append(res2)
    in_specs.append(w_spec)
    inputs.append(w2)

    if write_newres:
        out_shape = (jax.ShapeDtypeStruct((rows, hidden_k), y_dtype),
                     jax.ShapeDtypeStruct((rows, hidden_k), res_dtype))
        out_specs = (row_out_spec, row_out_spec)
    else:
        out_shape = jax.ShapeDtypeStruct((rows, hidden_k), y_dtype)
        out_specs = row_out_spec

    # Optional in-place residual update (quamba-style): alias the new-residual
    # output onto the residual input buffer (skipped if we padded the lanes,
    # since the padded residual is already a fresh temporary).
    io_aliases = {}
    if write_newres and inplace_residual and pad == 0:
        io_aliases = {1: 1}

    kernel = _make_rmsnorm_kernel(eps=float(eps), inv_hidden=1.0 / float(hidden),
                                  quantize=quantize, has_residual=has_residual,
                                  write_newres=write_newres)

    result = pl.pallas_call(
        kernel,
        out_shape=out_shape,
        grid_spec=pltpu.PrefetchScalarGridSpec(
            num_scalar_prefetch=0,
            grid=grid,
            in_specs=in_specs,
            out_specs=out_specs),
        input_output_aliases=io_aliases,
        compiler_params=pltpu.CompilerParams(
            # TODO(synk): if xprof shows the row grid serializing on one TC on
            # v7x, switch to pltpu.CORE_PARALLEL / an explicit core_map split.
            dimension_semantics=("parallel",),
            vmem_limit_bytes=vmem_limit),
    )(*inputs)

    if write_newres:
        y2, newres2 = result
    else:
        y2 = result
        newres2 = None

    if pad:
        y2 = y2[:, :hidden]
        if newres2 is not None:
            newres2 = newres2[:, :hidden]

    y = y2.reshape(orig_shape)

    if has_residual:
        if prenorm:
            return y, newres2.reshape(orig_shape)
        return y
    return (y, x) if prenorm else y


# ---------------------------------------------------------------------------
# Pure-JAX reference.
# ---------------------------------------------------------------------------
def _ref_rms_norm(x, weight, eps, output_scale, residual=None):
    z = x.astype(jnp.float32)
    if residual is not None:
        z = z + residual.astype(jnp.float32)
    rstd = lax.rsqrt(jnp.mean(z * z, axis=-1, keepdims=True) + eps)
    y = z * rstd * weight.astype(jnp.float32)
    if output_scale != 0.0:
        y = jnp.clip(jnp.round(y / output_scale), -128, 127).astype(jnp.int8)
    return y, z


if __name__ == "__main__":
    key = jax.random.PRNGKey(0)
    k_x, k_r, k_w = jax.random.split(key, 3)

    batch, seq, hidden = 2, 8, 32
    eps = 1e-5
    output_scale = 0.0125  # as would be set by FusedRMSNorm.from_fp16

    x = jax.random.normal(k_x, (batch, seq, hidden), dtype=jnp.float32)
    residual = jax.random.normal(k_r, (batch, seq, hidden), dtype=jnp.float32)
    # The module registers an uninitialized (hidden,) weight buffer; synthesize
    # a deterministic one here.
    weight = 1.0 + 0.02 * jax.random.normal(k_w, (hidden,), dtype=jnp.float32)

    ref_y_q, ref_res = _ref_rms_norm(x, weight, eps, output_scale, residual)
    ref_y_f, _ = _ref_rms_norm(x, weight, eps, 0.0)

    # 1) quantized path, residual + prenorm (two outputs, in-place residual).
    y_q, new_res = fused_rms_norm(x, weight, eps=eps, output_scale=output_scale,
                                  residual=residual, prenorm=True,
                                  inplace_residual=True)
    jax.block_until_ready((y_q, new_res))
    assert y_q.dtype == jnp.int8
    assert int(jnp.max(jnp.abs(y_q.astype(jnp.int32) -
                               ref_y_q.astype(jnp.int32)))) <= 1  # rounding slack
    assert jnp.allclose(new_res, ref_res, atol=1e-5, rtol=1e-5)

    # 2) quantized path, residual, prenorm=False (single-output variant).
    y_q2 = fused_rms_norm(x, weight, eps=eps, output_scale=output_scale,
                          residual=residual)
    jax.block_until_ready(y_q2)
    assert y_q2.dtype == jnp.int8
    assert int(jnp.max(jnp.abs(y_q2.astype(jnp.int32) -
                               ref_y_q.astype(jnp.int32)))) <= 1

    # 3) default module (output_scale = 0.0), no residual -> plain fp RMSNorm.
    y_f = fused_rms_norm(x, weight, eps=eps, output_scale=0.0)
    jax.block_until_ready(y_f)
    assert jnp.allclose(y_f, ref_y_f, atol=1e-5, rtol=1e-5)

    # 4) no residual, prenorm=True -> (y, x), still a single-output kernel.
    y_p, x_back = fused_rms_norm(x, weight, eps=eps, output_scale=0.0,
                                 prenorm=True)
    jax.block_until_ready((y_p, x_back))
    assert jnp.allclose(y_p, ref_y_f, atol=1e-5, rtol=1e-5)
    assert jnp.array_equal(x_back, x)

    # 5) row count not a multiple of 8 (full-slab single-block path).
    x_odd = jax.random.normal(k_x, (3, 5, hidden), dtype=jnp.float32)
    y_odd = fused_rms_norm(x_odd, weight, eps=eps, output_scale=0.0)
    jax.block_until_ready(y_odd)
    ref_odd, _ = _ref_rms_norm(x_odd, weight, eps, 0.0)
    assert jnp.allclose(y_odd, ref_odd, atol=1e-5, rtol=1e-5)

    # 6) force small blocks to exercise the multi-step, ragged-last-tile
    #    pipeline path (20 rows, block_rows=8 -> 3 steps, last tile partial).
    x_big = jax.random.normal(k_x, (4, 5, hidden), dtype=jnp.float32)
    r_big = jax.random.normal(k_r, (4, 5, hidden), dtype=jnp.float32)
    ref_y6, ref_r6 = _ref_rms_norm(x_big, weight, eps, output_scale, r_big)
    y6, nr6 = fused_rms_norm(x_big, weight, eps=eps, output_scale=output_scale,
                             residual=r_big, prenorm=True,
                             _block_rows_override=8)
    jax.block_until_ready((y6, nr6))
    assert y6.dtype == jnp.int8
    assert int(jnp.max(jnp.abs(y6.astype(jnp.int32) -
                               ref_y6.astype(jnp.int32)))) <= 1
    assert jnp.allclose(nr6, ref_r6, atol=1e-5, rtol=1e-5)

    print("KERNEL_OK")
</pallas_src>

<mosaic_0001>
module attributes {stable_mosaic.version = 11 : i64} {
  func.func @kernel(%arg0: i32, %arg1: memref<16x32xf32, #tpu.memory_space<vmem>>, %arg2: memref<16x32xf32, #tpu.memory_space<vmem>>, %arg3: memref<1x32xf32, #tpu.memory_space<vmem>>, %arg4: memref<16x32xi8, #tpu.memory_space<vmem>>, %arg5: memref<16x32xf32, #tpu.memory_space<vmem>>) attributes {dimension_semantics = [#tpu.dimension_semantics<parallel>], iteration_bounds = array<i64: 1>, scalar_prefetch = 0 : i64, scratch_operands = 0 : i64, tpu.core_type = #tpu.core_type<tc>, window_params = [{transform_indices = @transform_0, window_bounds = array<i64: 16, 32>}, {transform_indices = @transform_1, window_bounds = array<i64: 16, 32>}, {pipeline_mode = #tpu.pipeline_mode<synchronous>, transform_indices = @transform_2, window_bounds = array<i64: 1, 32>}, {transform_indices = @transform_3, window_bounds = array<i64: 16, 32>}, {transform_indices = @transform_4, window_bounds = array<i64: 16, 32>}]} {
    %c0 = arith.constant 0 : index
    %c0_0 = arith.constant 0 : index
    %0 = vector.load %arg1[%c0, %c0_0] : memref<16x32xf32, #tpu.memory_space<vmem>>, vector<16x32xf32>
    %c0_1 = arith.constant 0 : index
    %c0_2 = arith.constant 0 : index
    %1 = vector.load %arg2[%c0_1, %c0_2] : memref<16x32xf32, #tpu.memory_space<vmem>>, vector<16x32xf32>
    %2 = arith.addf %0, %1 : vector<16x32xf32>
    %c0_3 = arith.constant 0 : index
    %c0_4 = arith.constant 0 : index
    %3 = vector.load %arg5[%c0_3, %c0_4] : memref<16x32xf32, #tpu.memory_space<vmem>>, vector<16x32xf32>
    tpu.vector_store %arg5[%c0_3, %c0_4], %2 {strides = array<i32>} : memref<16x32xf32, #tpu.memory_space<vmem>>, vector<16x32xf32>,
    %4 = arith.mulf %2, %2 : vector<16x32xf32>
    %cst = arith.constant dense<0.000000e+00> : vector<16xf32>
    %5 = vector.multi_reduction <add>, %4, %cst [1] : vector<16x32xf32> to vector<16xf32>
    %6 = vector.shape_cast %5 : vector<16xf32> to vector<16x1xf32>
    %cst_5 = arith.constant 3.125000e-02 : f32
    %7 = vector.broadcast %cst_5 : f32 to vector<16x1xf32>
    %8 = arith.mulf %6, %7 : vector<16x1xf32>
    %cst_6 = arith.constant 9.99999974E-6 : f32
    %9 = vector.broadcast %cst_6 : f32 to vector<16x1xf32>
    %10 = arith.addf %8, %9 : vector<16x1xf32>
    %11 = math.rsqrt %10 : vector<16x1xf32>
    %12 = vector.broadcast %11 : vector<16x1xf32> to vector<16x32xf32>
    %13 = arith.mulf %2, %12 : vector<16x32xf32>
    %c0_7 = arith.constant 0 : index
    %c0_8 = arith.constant 0 : index
    %14 = vector.load %arg3[%c0_7, %c0_8] : memref<1x32xf32, #tpu.memory_space<vmem>>, vector<1x32xf32>
    %15 = vector.broadcast %14 : vector<1x32xf32> to vector<16x32xf32>
    %16 = arith.mulf %13, %15 : vector<16x32xf32>
    %17 = math.roundeven %16 : vector<16x32xf32>
    %cst_9 = arith.constant -1.280000e+02 : f32
    %cst_10 = arith.constant 1.270000e+02 : f32
    %18 = vector.broadcast %cst_9 : f32 to vector<16x32xf32>
    %19 = arith.maximumf %18, %17 : vector<16x32xf32>
    %20 = vector.broadcast %cst_10 : f32 to vector<16x32xf32>
    %21 = arith.minimumf %20, %19 : vector<16x32xf32>
    %22 = arith.fptosi %21 : vector<16x32xf32> to vector<16x32xi8>
    %c0_11 = arith.constant 0 : index
    %c0_12 = arith.constant 0 : index
    %23 = vector.load %arg4[%c0_11, %c0_12] : memref<16x32xi8, #tpu.memory_space<vmem>>, vector<16x32xi8>
    tpu.vector_store %arg4[%c0_11, %c0_12], %22 {strides = array<i32>} : memref<16x32xi8, #tpu.memory_space<vmem>>, vector<16x32xi8>,
    return
  }
  func.func @transform_0(%arg0: i32) -> (i32, i32) {
    %c0_i32 = arith.constant 0 : i32
    %c0_i32_0 = arith.constant 0 : i32
    return %arg0, %c0_i32 : i32, i32
  }
  func.func @transform_1(%arg0: i32) -> (i32, i32) {
    %c0_i32 = arith.constant 0 : i32
    %c0_i32_0 = arith.constant 0 : i32
    return %arg0, %c0_i32 : i32, i32
  }
  func.func @transform_2(%arg0: i32) -> (i32, i32) {
    %c0_i32 = arith.constant 0 : i32
    %c0_i32_0 = arith.constant 0 : i32
    %c0_i32_1 = arith.constant 0 : i32
    return %c0_i32, %c0_i32_0 : i32, i32
  }
  func.func @transform_3(%arg0: i32) -> (i32, i32) {
    %c0_i32 = arith.constant 0 : i32
    %c0_i32_0 = arith.constant 0 : i32
    return %arg0, %c0_i32 : i32, i32
  }
  func.func @transform_4(%arg0: i32) -> (i32, i32) {
    %c0_i32 = arith.constant 0 : i32
    %c0_i32_0 = arith.constant 0 : i32
    return %arg0, %c0_i32 : i32, i32
  }
}

</mosaic_0001>

<llo_original>
// kernel: tpu_custom_call.1
$region0: #{tpu_custom_call.1}
  #allocation0 [shape = 'u32[]', space=smem, size = 0x4, offset = 0x4, fixed_abs, tag = 'smem constant byte address 0x4 - core index']
  #allocation1 [shape = 'u32[144,128]{1,0:T(1,128)}', space=vmem, size = 0x12000, scoped, tag = 'internal scratch']
  %s0 = inlined_call_operand.vmem [shape: f32[16,32], index: 0, kind: input, shape index: {}]
  %s1 = inlined_call_operand.hbm [shape: f32[16,32], index: 1, kind: input, shape index: {}, may-alias: {1,4}]
  %s2 = inlined_call_operand.vmem [shape: f32[1,32], index: 2, kind: input, shape index: {}]
  %s3 = inlined_call_operand.hbm [shape: s8[16,32], index: 3, kind: output, shape index: {0}]
  %s4 = inlined_call_operand.hbm [shape: f32[16,32], index: 4, kind: output, shape index: {1}, may-alias: {1,4}]
  %5 = xla_tuple %s3, %s4
  %s6 = sld [smem:[#allocation0]]
  $region34: #{tpu_custom_call.1} parent=0
    _
  %s8 = ssub.s32 1, %s6
  %s9 = scalar_select 0, %s8, %s6
  $region1: #{tpu_custom_call.1} parent=0
    #allocation2 [shape = 'u8[8192]{0}', space=vmem, size = 0x2000, scoped, tag = 'input window, operand 1, single buffered']
    #allocation3 [shape = 's32[1]{0}', space=sflag, size = 0x4, scoped, tag = 'scoped memory for tpu_custom_call.1']
    #allocation4 [shape = 's32[1]{0}', space=sflag, size = 0x4, scoped, tag = 'scoped memory for tpu_custom_call.1']
    #allocation5 [shape = 'u8[2048]{0}', space=vmem, size = 0x800, scoped, tag = 'output window, operand 0, single buffered']
    #allocation6 [shape = 'u8[8192]{0}', space=vmem, size = 0x2000, scoped, tag = 'output window, operand 1, single buffered']
    #allocation7 [shape = 's32[1]{0}', space=sflag, size = 0x4, scoped, tag = 'scoped memory for tpu_custom_call.1']
    %10 = vsyncpa [#allocation3], 0
    %11 = vsyncpa [#allocation4], 0
    %12 = vsyncpa [#allocation7], 0
    // Predicated region
    $region2: #{tpu_custom_call.1} parent=1 // pred_check
      _
    $region3: #{tpu_custom_call.1} parent=1 // pred_check_branch
      %14 = sbr.rel (0) target = $region5
    $region4: #{tpu_custom_call.1} parent=1 // pred_region
      _
    $region5: #{tpu_custom_call.1} parent=1 // pred_fallthru
      _
    // Predicated region
    $region6: #{tpu_custom_call.1} parent=1 // pred_check
      _
    $region7: #{tpu_custom_call.1} parent=1 // pred_check_branch
      %16 = sbr.rel (0) target = $region9
    $region8: #{tpu_custom_call.1} parent=1 // pred_region
      %s18 = ssub.s32 256, 256
      %19 = vsyncadd [#allocation3], %s18
      %s20 = sshll.u32 [#allocation2], 4
      %s21 = int_to_ptr.vmem [resolvable:$true] %s20
      %26 = dma.hbm_to_vmem [thread:$0]  %s1, 256, %s21, [#allocation3], 128, 128, 8
    $region9: #{tpu_custom_call.1} parent=1 // pred_fallthru
      _
    // Predicated region
    $region10: #{tpu_custom_call.1} parent=1 // pred_check
      _
    $region11: #{tpu_custom_call.1} parent=1 // pred_check_branch
      %28 = sbr.rel (0) target = $region13
    $region12: #{tpu_custom_call.1} parent=1 // pred_region
      _
    $region13: #{tpu_custom_call.1} parent=1 // pred_fallthru
      _
    // Predicated region
    $region14: #{tpu_custom_call.1} parent=1 // pred_check
      _
    $region15: #{tpu_custom_call.1} parent=1 // pred_check_branch
      %30 = sbr.rel (0) target = $region17
    $region16: #{tpu_custom_call.1} parent=1 // pred_region
      %31 = dma.done [#allocation3], 256
    $region17: #{tpu_custom_call.1} parent=1 // pred_fallthru
      _
    %v32 = vld [vmem:[%s0] sm:$0xff]
    %v33 = vld [vmem:[%s0 + $0x8] sm:$0xff]
    %v34 = vld [vmem:[#allocation2] sm:$0xff]
    %v35 = vld [vmem:[#allocation2 + $0x8] sm:$0xff]
    %v36 = vadd.f32 %v32, %v34
    %v37 = vadd.f32 %v33, %v35
    %vm38 = vcmask 261120
    %39 = vst.msk [vmem:[#allocation6] sm:$0xff] %vm38, %v36
    %40 = vst.msk [vmem:[#allocation6 + $0x8] sm:$0xff] %vm38, %v37
    %v41 = vmul.f32 %v36, %v36
    %v42 = vmul.f32 %v37, %v37
    %v43 = vsel %vm38, %v41, 0.0
    %44 = vadd.xlane.f32.xlu0 %v43
    %v45 = vpop.xlane.xlu0 %44
    %v46 = vsel %vm38, %v42, 0.0
    %47 = vadd.xlane.f32.xlu0 %v46
    %v48 = vpop.xlane.xlu0 %47
    %v49 = vmul.f32 %v45, 0.03125
    %v50 = vmul.f32 %v48, 0.03125
    %v51 = vadd.f32 %v49, 1e-05
    %v52 = vadd.f32 %v50, 1e-05
    %v53 = vrsqrt.pop %v51
    %v54 = vrsqrt.pop %v52
    %v55 = vmul.f32 %v36, %v53
    %v56 = vmul.f32 %v37, %v54
    %v57 = vld [vmem:[%s2] sm:$0x1]
    %v59 = vlaneseq
    %v60 = vshrl.u32 %v59, 7
    %v61 = vsub.s32 0, %v60
    %v62 = vrot.slane %v57, %v61
    %v64 = vmul.f32 %v55, %v62
    %v65 = vmul.f32 %v56, %v62
    %v66 = vround.ne.pseudo %v64
    %v67 = vround.ne.pseudo %v65
    %v68 = vmax.f32 %v66, -128.0
    %v69 = vmax.f32 %v67, -128.0
    %v70 = vmin.f32 %v68, 127.0
    %v71 = vmin.f32 %v69, 127.0
    %v72 = vtrunc.f32 %v70
    %v73 = vtrunc.f32 %v71
    %v74 = vpack.c.f32.eXmY %v72, %v73, 312
    %v78 = vpack.c.b8 %v74, %v74
    %v80 = vunpack.c.0.s8 %v78
    %v81 = vunpack.c.1.s8 %v78
    %v82 = vpack.c.b16 %v80, %v80
    %v83 = vpack.c.b8 %v82, %v82
    %v84 = vpack.c.b16 %v81, %v81
    %v85 = vpack.c.b8 %v84, %v84
    %vm86 = vcmask 254976
    %87 = vst.msk [vmem:[#allocation5] sm:$0x3] %vm86, %v83
    %88 = vst.msk [vmem:[#allocation5 + $0x2] sm:$0x3] %vm86, %v85
    // Predicated region
    $region18: #{tpu_custom_call.1} parent=1 // pred_check
      _
    $region19: #{tpu_custom_call.1} parent=1 // pred_check_branch
      %90 = sbr.rel (0) target = $region21
    $region20: #{tpu_custom_call.1} parent=1 // pred_region
      %s92 = ssub.s32 64, 64
      %93 = vsyncadd [#allocation4], %s92
      %s94 = sshll.u32 [#allocation5], 4
      %s95 = int_to_ptr.vmem [resolvable:$true] %s94
      %100 = dma.vmem_to_hbm [thread:$0]  %s95, 64, %s3, [#allocation4], 32, 32, 2
    $region21: #{tpu_custom_call.1} parent=1 // pred_fallthru
      _
    // Predicated region
    $region22: #{tpu_custom_call.1} parent=1 // pred_check
      _
    $region23: #{tpu_custom_call.1} parent=1 // pred_check_branch
      %102 = sbr.rel (0) target = $region25
    $region24: #{tpu_custom_call.1} parent=1 // pred_region
      %s104 = ssub.s32 256, 256
      %105 = vsyncadd [#allocation7], %s104
      %s106 = sshll.u32 [#allocation6], 4
      %s107 = int_to_ptr.vmem [resolvable:$true] %s106
      %112 = dma.vmem_to_hbm [thread:$0]  %s107, 256, %s4, [#allocation7], 128, 128, 8
    $region25: #{tpu_custom_call.1} parent=1 // pred_fallthru
      _
    // Predicated region
    $region26: #{tpu_custom_call.1} parent=1 // pred_check
      _
    $region27: #{tpu_custom_call.1} parent=1 // pred_check_branch
      %114 = sbr.rel (0) target = $region29
    $region28: #{tpu_custom_call.1} parent=1 // pred_region
      %115 = dma.done [#allocation4], 64
    $region29: #{tpu_custom_call.1} parent=1 // pred_fallthru
      _
    // Predicated region
    $region30: #{tpu_custom_call.1} parent=1 // pred_check
      _
    $region31: #{tpu_custom_call.1} parent=1 // pred_check_branch
      %117 = sbr.rel (0) target = $region33
    $region32: #{tpu_custom_call.1} parent=1 // pred_region
      %118 = dma.done [#allocation7], 256
    $region33: #{tpu_custom_call.1} parent=1 // pred_fallthru
      _
    %119 = vsyncpa [#allocation3], 1
    %120 = vsyncpa [#allocation4], 1
    %121 = vsyncpa [#allocation7], 1

</llo_original>
